<compile_context>
chip_gen: v7x
topology: tpu7x:2x2x1
jax: 0.10.0
libtpu: 0.0.40
codegen_flags: <defaults>
</compile_context>

<pallas_src>
import functools

import jax
import jax.numpy as jnp
from jax.experimental import pallas as pl
from jax.experimental.pallas import tpu as pltpu


def pack_params(w_ih, w_hh, b_ih, b_hh, w_lin, b_lin):
    """One-time packing of all LSTM + Linear params into a single f32 slab.

    Call once, outside the per-call hot path, and reuse the slab.
    Row layout (lane width = 4H):
      [0      : H    ]  W_hh^T           (H, 4H)   tile-aligned for the loop matmul
      [H      : H+F  ]  W_ih^T           (F, 4H)
      [H+F           ]  b_ih + b_hh      (4H,)
      [H+F+1         ]  w_lin            (lanes 0:H)
      [H+F+2         ]  b_lin            (lane 0)
    padded up to a multiple of 8 sublanes.
    """
    H4, F = w_ih.shape
    H = H4 // 4
    rows = H + F + 3
    rows_pad = ((rows + 7) // 8) * 8
    slab = jnp.zeros((rows_pad, H4), jnp.float32)
    slab = slab.at[0:H, :].set(jnp.transpose(w_hh).astype(jnp.float32))
    slab = slab.at[H:H + F, :].set(jnp.transpose(w_ih).astype(jnp.float32))
    slab = slab.at[H + F, :].set((b_ih + b_hh).astype(jnp.float32))
    slab = slab.at[H + F + 1, 0:H].set(w_lin.reshape(H).astype(jnp.float32))
    slab = slab.at[H + F + 2, 0].set(b_lin.reshape(()).astype(jnp.float32))
    return slab


def _lstm_kernel(x_ref, p_ref, out_ref, *, T, B, H, F):
    # ---- unpack params: static slices of the single VMEM slab (one DMA) ----
    whh = p_ref[0:H, :]                           # (H, 4H), tile-aligned
    wih = p_ref[H:H + F, :]                       # (F, 4H)
    bias = p_ref[H + F:H + F + 1, :]              # (1, 4H) -- fused b_ih + b_hh
    wlin = p_ref[H + F + 1:H + F + 2, 0:H]        # (1, H)
    blin = p_ref[H + F + 2:H + F + 3, 0:1]        # (1, 1)

    # ---- hoisted input projection for ALL timesteps (off the serial chain) ----
    # One tiny (T,F)@(F,4H) MXU pass per batch row; bias broadcast once.
    xw_b = [
        jnp.dot(x_ref[b], wih, preferred_element_type=jnp.float32) + bias   # (T, 4H)
        for b in range(B)
    ]
    # Per-step (B, 4H) gate blocks, each re-gathered to sublane 0 exactly ONCE
    # here (not inside the recurrence), so the serial loop adds a tile-aligned
    # block straight onto the (B, 4H) matmul result.
    xw_t = [
        jnp.concatenate([xw_b[b][t:t + 1, :] for b in range(B)], axis=0)    # (B, 4H)
        for t in range(T)
    ]

    def activate(gates, c_prev, first):
        # Full-width activations: 2 EUP pushes per step (not 4); slice after.
        sig = jax.nn.sigmoid(gates)
        tnh = jnp.tanh(gates)
        i_g = sig[:, 0 * H:1 * H]
        g_g = tnh[:, 2 * H:3 * H]
        o_g = sig[:, 3 * H:4 * H]
        if first:                      # h0 = c0 = 0 -> f_g * c_prev == 0
            c_new = i_g * g_g
        else:
            f_g = sig[:, 1 * H:2 * H]
            c_new = f_g * c_prev + i_g * g_g
        h_new = o_g * jnp.tanh(c_new)
        return h_new, c_new

    # ---- t = 0 peeled: no h @ W_hh^T matmul, no f*c multiply ----
    h, c = activate(xw_t[0], None, first=True)

    # ---- serial recurrence, fully unrolled (T small & static).
    # Switch to lax.fori_loop + a T-chunked grid if T grows (compile time).
    # The loop-invariant RHS (whh) is left to Mosaic's scheduler; explicit
    # pltpu.matmul_push_rhs staging is only worth it if a bundle dump shows the
    # 32-row RHS being re-pushed every step.
    for t in range(1, T):
        gates = xw_t[t] + jnp.dot(h, whh, preferred_element_type=jnp.float32)
        h, c = activate(gates, c, first=False)

    # ---- final Linear(H -> 1): VPU multiply + lane reduction (no N=1 MXU pass) ----
    out_ref[...] = jnp.sum(h * wlin, axis=-1, keepdims=True) + blin


def shallow_regression_lstm(x, packed_params, *, hidden_units, batch_block=None):
    """x: (B, T, F) float32; packed_params from pack_params(). Returns (B,) f32."""
    B, T, F = x.shape
    H = hidden_units
    if batch_block is None:
        batch_block = B        # single program at small B; use a multiple of 8
                               # to shard a larger batch across v7x's two TCs.
    assert B % batch_block == 0
    assert batch_block == B or batch_block % 8 == 0, (
        "output sublane dim must be 8-aligned when splitting the batch")

    kernel = functools.partial(_lstm_kernel, T=T, B=batch_block, H=H, F=F)
    grid = (B // batch_block,)

    out = pl.pallas_call(
        kernel,
        out_shape=jax.ShapeDtypeStruct((B, 1), jnp.float32),
        grid=grid,
        in_specs=[
            pl.BlockSpec((batch_block, T, F), lambda i: (i, 0, 0)),
            pl.BlockSpec(packed_params.shape, lambda i: (0, 0)),
        ],
        out_specs=pl.BlockSpec((batch_block, 1), lambda i: (i, 0)),
        compiler_params=pltpu.CompilerParams(
            dimension_semantics=("parallel",),   # v7x: batch shards across TCs
            # Footprint today is <100 KiB; keep an explicit ceiling below v7x's
            # 64 MiB physical VMEM. Chunk T with a grid axis / emit_pipeline
            # before x + xw (~ T*B*(F+4H)*4 bytes) outgrows this budget.
            vmem_limit_bytes=32 * 1024 * 1024,
        ),
    )(x, packed_params)

    return out.reshape(B)                        # .flatten() in PyTorch


def _reference(x, w_ih, w_hh, b_ih, b_hh, w_lin, b_lin):
    """Pure-JAX reference of the same forward pass (lax.scan over time)."""
    B, T, F = x.shape
    H = w_hh.shape[1]
    h0 = jnp.zeros((B, H), jnp.float32)
    c0 = jnp.zeros((B, H), jnp.float32)

    def step(carry, x_t):
        h, c = carry
        gates = x_t @ w_ih.T + h @ w_hh.T + b_ih + b_hh
        i = jax.nn.sigmoid(gates[:, 0 * H:1 * H])
        f = jax.nn.sigmoid(gates[:, 1 * H:2 * H])
        g = jnp.tanh(gates[:, 2 * H:3 * H])
        o = jax.nn.sigmoid(gates[:, 3 * H:4 * H])
        c_new = f * c + i * g
        h_new = o * jnp.tanh(c_new)
        return (h_new, c_new), None

    (h_T, _), _ = jax.lax.scan(step, (h0, c0), jnp.transpose(x, (1, 0, 2)))
    return (h_T @ w_lin.T + b_lin).reshape(B)


if __name__ == "__main__":
    # Small shapes consistent with the module: batch=2, seq=8, features=4, hidden=32.
    B, T, F, H = 2, 8, 4, 32

    key = jax.random.PRNGKey(0)
    kx, k1, k2, k3, k4, k5, k6 = jax.random.split(key, 7)

    # PyTorch-style uniform(-1/sqrt(H), 1/sqrt(H)) parameter init.
    bound = 1.0 / jnp.sqrt(jnp.float32(H))
    x = jax.random.normal(kx, (B, T, F), jnp.float32)
    w_ih = jax.random.uniform(k1, (4 * H, F), jnp.float32, -bound, bound)
    w_hh = jax.random.uniform(k2, (4 * H, H), jnp.float32, -bound, bound)
    b_ih = jax.random.uniform(k3, (4 * H,), jnp.float32, -bound, bound)
    b_hh = jax.random.uniform(k4, (4 * H,), jnp.float32, -bound, bound)
    w_lin = jax.random.uniform(k5, (1, H), jnp.float32, -bound, bound)
    b_lin = jax.random.uniform(k6, (1,), jnp.float32, -bound, bound)

    # One-time parameter packing (kept out of the per-call hot path).
    params = jax.block_until_ready(pack_params(w_ih, w_hh, b_ih, b_hh, w_lin, b_lin))

    out = shallow_regression_lstm(x, params, hidden_units=H)
    out = jax.block_until_ready(out)

    ref = _reference(x, w_ih, w_hh, b_ih, b_hh, w_lin, b_lin)
    assert out.shape == (B,)
    assert jnp.allclose(out, ref, atol=1e-5, rtol=1e-5), (out, ref)

    print("KERNEL_OK")
</pallas_src>

<mosaic_0001>
module attributes {stable_mosaic.version = 11 : i64} {
  func.func @_lstm_kernel(%arg0: i32, %arg1: memref<2x8x4xf32, #tpu.memory_space<vmem>>, %arg2: memref<40x128xf32, #tpu.memory_space<vmem>>, %arg3: memref<2x1xf32, #tpu.memory_space<vmem>>) attributes {dimension_semantics = [#tpu.dimension_semantics<parallel>], iteration_bounds = array<i64: 1>, scalar_prefetch = 0 : i64, scratch_operands = 0 : i64, tpu.core_type = #tpu.core_type<tc>, window_params = [{transform_indices = @transform_0, window_bounds = array<i64: 2, 8, 4>}, {pipeline_mode = #tpu.pipeline_mode<synchronous>, transform_indices = @transform_1, window_bounds = array<i64: 40, 128>}, {transform_indices = @transform_2, window_bounds = array<i64: 2, 1>}]} {
    %c0 = arith.constant 0 : index
    %c0_0 = arith.constant 0 : index
    %0 = vector.load %arg2[%c0, %c0_0] : memref<40x128xf32, #tpu.memory_space<vmem>>, vector<32x128xf32>
    %c32 = arith.constant 32 : index
    %c0_1 = arith.constant 0 : index
    %1 = vector.load %arg2[%c32, %c0_1] : memref<40x128xf32, #tpu.memory_space<vmem>>, vector<4x128xf32>
    %c36 = arith.constant 36 : index
    %c0_2 = arith.constant 0 : index
    %2 = vector.load %arg2[%c36, %c0_2] : memref<40x128xf32, #tpu.memory_space<vmem>>, vector<1x128xf32>
    %c37 = arith.constant 37 : index
    %c0_3 = arith.constant 0 : index
    %3 = vector.load %arg2[%c37, %c0_3] : memref<40x128xf32, #tpu.memory_space<vmem>>, vector<1x32xf32>
    %c38 = arith.constant 38 : index
    %c0_4 = arith.constant 0 : index
    %4 = vector.load %arg2[%c38, %c0_4] : memref<40x128xf32, #tpu.memory_space<vmem>>, vector<1x1xf32>
    %c0_5 = arith.constant 0 : index
    %c0_6 = arith.constant 0 : index
    %c0_7 = arith.constant 0 : index
    %5 = vector.load %arg1[%c0_5, %c0_6, %c0_7] : memref<2x8x4xf32, #tpu.memory_space<vmem>>, vector<1x8x4xf32>
    %6 = vector.shape_cast %5 : vector<1x8x4xf32> to vector<8x4xf32>
    %cst = arith.constant dense<0.000000e+00> : vector<8x128xf32>
    %7 = tpu.matmul %6, %1, %cst {dimension_numbers = #tpu.dot_dimension_numbers<[1], [0], [0], [1], [0, 0, 1, 1], [], []>} : vector<8x4xf32>, vector<4x128xf32>, vector<8x128xf32> -> vector<8x128xf32>
    %8 = vector.broadcast %2 : vector<1x128xf32> to vector<8x128xf32>
    %9 = arith.addf %7, %8 : vector<8x128xf32>
    %c1 = arith.constant 1 : index
    %c0_8 = arith.constant 0 : index
    %c0_9 = arith.constant 0 : index
    %10 = vector.load %arg1[%c1, %c0_8, %c0_9] : memref<2x8x4xf32, #tpu.memory_space<vmem>>, vector<1x8x4xf32>
    %11 = vector.shape_cast %10 : vector<1x8x4xf32> to vector<8x4xf32>
    %cst_10 = arith.constant dense<0.000000e+00> : vector<8x128xf32>
    %12 = tpu.matmul %11, %1, %cst_10 {dimension_numbers = #tpu.dot_dimension_numbers<[1], [0], [0], [1], [0, 0, 1, 1], [], []>} : vector<8x4xf32>, vector<4x128xf32>, vector<8x128xf32> -> vector<8x128xf32>
    %13 = vector.broadcast %2 : vector<1x128xf32> to vector<8x128xf32>
    %14 = arith.addf %12, %13 : vector<8x128xf32>
    %15 = vector.extract_strided_slice %9 {offsets = [0, 0], sizes = [1, 128], strides = [1, 1]} : vector<8x128xf32> to vector<1x128xf32>
    %16 = vector.extract_strided_slice %14 {offsets = [0, 0], sizes = [1, 128], strides = [1, 1]} : vector<8x128xf32> to vector<1x128xf32>
    %17 = tpu.concatenate %15, %16 in 0 : vector<1x128xf32>, vector<1x128xf32> -> vector<2x128xf32>
    %18 = vector.extract_strided_slice %9 {offsets = [1, 0], sizes = [1, 128], strides = [1, 1]} : vector<8x128xf32> to vector<1x128xf32>
    %19 = vector.extract_strided_slice %14 {offsets = [1, 0], sizes = [1, 128], strides = [1, 1]} : vector<8x128xf32> to vector<1x128xf32>
    %20 = tpu.concatenate %18, %19 in 0 : vector<1x128xf32>, vector<1x128xf32> -> vector<2x128xf32>
    %21 = vector.extract_strided_slice %9 {offsets = [2, 0], sizes = [1, 128], strides = [1, 1]} : vector<8x128xf32> to vector<1x128xf32>
    %22 = vector.extract_strided_slice %14 {offsets = [2, 0], sizes = [1, 128], strides = [1, 1]} : vector<8x128xf32> to vector<1x128xf32>
    %23 = tpu.concatenate %21, %22 in 0 : vector<1x128xf32>, vector<1x128xf32> -> vector<2x128xf32>
    %24 = vector.extract_strided_slice %9 {offsets = [3, 0], sizes = [1, 128], strides = [1, 1]} : vector<8x128xf32> to vector<1x128xf32>
    %25 = vector.extract_strided_slice %14 {offsets = [3, 0], sizes = [1, 128], strides = [1, 1]} : vector<8x128xf32> to vector<1x128xf32>
    %26 = tpu.concatenate %24, %25 in 0 : vector<1x128xf32>, vector<1x128xf32> -> vector<2x128xf32>
    %27 = vector.extract_strided_slice %9 {offsets = [4, 0], sizes = [1, 128], strides = [1, 1]} : vector<8x128xf32> to vector<1x128xf32>
    %28 = vector.extract_strided_slice %14 {offsets = [4, 0], sizes = [1, 128], strides = [1, 1]} : vector<8x128xf32> to vector<1x128xf32>
    %29 = tpu.concatenate %27, %28 in 0 : vector<1x128xf32>, vector<1x128xf32> -> vector<2x128xf32>
    %30 = vector.extract_strided_slice %9 {offsets = [5, 0], sizes = [1, 128], strides = [1, 1]} : vector<8x128xf32> to vector<1x128xf32>
    %31 = vector.extract_strided_slice %14 {offsets = [5, 0], sizes = [1, 128], strides = [1, 1]} : vector<8x128xf32> to vector<1x128xf32>
    %32 = tpu.concatenate %30, %31 in 0 : vector<1x128xf32>, vector<1x128xf32> -> vector<2x128xf32>
    %33 = vector.extract_strided_slice %9 {offsets = [6, 0], sizes = [1, 128], strides = [1, 1]} : vector<8x128xf32> to vector<1x128xf32>
    %34 = vector.extract_strided_slice %14 {offsets = [6, 0], sizes = [1, 128], strides = [1, 1]} : vector<8x128xf32> to vector<1x128xf32>
    %35 = tpu.concatenate %33, %34 in 0 : vector<1x128xf32>, vector<1x128xf32> -> vector<2x128xf32>
    %36 = vector.extract_strided_slice %9 {offsets = [7, 0], sizes = [1, 128], strides = [1, 1]} : vector<8x128xf32> to vector<1x128xf32>
    %37 = vector.extract_strided_slice %14 {offsets = [7, 0], sizes = [1, 128], strides = [1, 1]} : vector<8x128xf32> to vector<1x128xf32>
    %38 = tpu.concatenate %36, %37 in 0 : vector<1x128xf32>, vector<1x128xf32> -> vector<2x128xf32>
    %39 = arith.negf %17 : vector<2x128xf32>
    %40 = math.exp %39 : vector<2x128xf32>
    %cst_11 = arith.constant 1.000000e+00 : f32
    %41 = vector.broadcast %cst_11 : f32 to vector<2x128xf32>
    %42 = arith.addf %41, %40 : vector<2x128xf32>
    %43 = arith.divf %41, %42 : vector<2x128xf32>
    %44 = math.tanh %17 : vector<2x128xf32>
    %45 = vector.extract_strided_slice %43 {offsets = [0, 0], sizes = [2, 32], strides = [1, 1]} : vector<2x128xf32> to vector<2x32xf32>
    %46 = vector.extract_strided_slice %44 {offsets = [0, 64], sizes = [2, 32], strides = [1, 1]} : vector<2x128xf32> to vector<2x32xf32>
    %47 = vector.extract_strided_slice %43 {offsets = [0, 96], sizes = [2, 32], strides = [1, 1]} : vector<2x128xf32> to vector<2x32xf32>
    %48 = arith.mulf %45, %46 : vector<2x32xf32>
    %49 = math.tanh %48 : vector<2x32xf32>
    %50 = arith.mulf %47, %49 : vector<2x32xf32>
    %cst_12 = arith.constant dense<0.000000e+00> : vector<2x128xf32>
    %51 = tpu.matmul %50, %0, %cst_12 {dimension_numbers = #tpu.dot_dimension_numbers<[1], [0], [0], [1], [0, 0, 1, 1], [], []>} : vector<2x32xf32>, vector<32x128xf32>, vector<2x128xf32> -> vector<2x128xf32>
    %52 = arith.addf %20, %51 : vector<2x128xf32>
    %53 = arith.negf %52 : vector<2x128xf32>
    %54 = math.exp %53 : vector<2x128xf32>
    %cst_13 = arith.constant 1.000000e+00 : f32
    %55 = vector.broadcast %cst_13 : f32 to vector<2x128xf32>
    %56 = arith.addf %55, %54 : vector<2x128xf32>
    %57 = arith.divf %55, %56 : vector<2x128xf32>
    %58 = math.tanh %52 : vector<2x128xf32>
    %59 = vector.extract_strided_slice %57 {offsets = [0, 0], sizes = [2, 32], strides = [1, 1]} : vector<2x128xf32> to vector<2x32xf32>
    %60 = vector.extract_strided_slice %58 {offsets = [0, 64], sizes = [2, 32], strides = [1, 1]} : vector<2x128xf32> to vector<2x32xf32>
    %61 = vector.extract_strided_slice %57 {offsets = [0, 96], sizes = [2, 32], strides = [1, 1]} : vector<2x128xf32> to vector<2x32xf32>
    %62 = vector.extract_strided_slice %57 {offsets = [0, 32], sizes = [2, 32], strides = [1, 1]} : vector<2x128xf32> to vector<2x32xf32>
    %63 = arith.mulf %62, %48 : vector<2x32xf32>
    %64 = arith.mulf %59, %60 : vector<2x32xf32>
    %65 = arith.addf %63, %64 : vector<2x32xf32>
    %66 = math.tanh %65 : vector<2x32xf32>
    %67 = arith.mulf %61, %66 : vector<2x32xf32>
    %cst_14 = arith.constant dense<0.000000e+00> : vector<2x128xf32>
    %68 = tpu.matmul %67, %0, %cst_14 {dimension_numbers = #tpu.dot_dimension_numbers<[1], [0], [0], [1], [0, 0, 1, 1], [], []>} : vector<2x32xf32>, vector<32x128xf32>, vector<2x128xf32> -> vector<2x128xf32>
    %69 = arith.addf %23, %68 : vector<2x128xf32>
    %70 = arith.negf %69 : vector<2x128xf32>
    %71 = math.exp %70 : vector<2x128xf32>
    %cst_15 = arith.constant 1.000000e+00 : f32
    %72 = vector.broadcast %cst_15 : f32 to vector<2x128xf32>
    %73 = arith.addf %72, %71 : vector<2x128xf32>
    %74 = arith.divf %72, %73 : vector<2x128xf32>
    %75 = math.tanh %69 : vector<2x128xf32>
    %76 = vector.extract_strided_slice %74 {offsets = [0, 0], sizes = [2, 32], strides = [1, 1]} : vector<2x128xf32> to vector<2x32xf32>
    %77 = vector.extract_strided_slice %75 {offsets = [0, 64], sizes = [2, 32], strides = [1, 1]} : vector<2x128xf32> to vector<2x32xf32>
    %78 = vector.extract_strided_slice %74 {offsets = [0, 96], sizes = [2, 32], strides = [1, 1]} : vector<2x128xf32> to vector<2x32xf32>
    %79 = vector.extract_strided_slice %74 {offsets = [0, 32], sizes = [2, 32], strides = [1, 1]} : vector<2x128xf32> to vector<2x32xf32>
    %80 = arith.mulf %79, %65 : vector<2x32xf32>
    %81 = arith.mulf %76, %77 : vector<2x32xf32>
    %82 = arith.addf %80, %81 : vector<2x32xf32>
    %83 = math.tanh %82 : vector<2x32xf32>
    %84 = arith.mulf %78, %83 : vector<2x32xf32>
    %cst_16 = arith.constant dense<0.000000e+00> : vector<2x128xf32>
    %85 = tpu.matmul %84, %0, %cst_16 {dimension_numbers = #tpu.dot_dimension_numbers<[1], [0], [0], [1], [0, 0, 1, 1], [], []>} : vector<2x32xf32>, vector<32x128xf32>, vector<2x128xf32> -> vector<2x128xf32>
    %86 = arith.addf %26, %85 : vector<2x128xf32>
    %87 = arith.negf %86 : vector<2x128xf32>
    %88 = math.exp %87 : vector<2x128xf32>
    %cst_17 = arith.constant 1.000000e+00 : f32
    %89 = vector.broadcast %cst_17 : f32 to vector<2x128xf32>
    %90 = arith.addf %89, %88 : vector<2x128xf32>
    %91 = arith.divf %89, %90 : vector<2x128xf32>
    %92 = math.tanh %86 : vector<2x128xf32>
    %93 = vector.extract_strided_slice %91 {offsets = [0, 0], sizes = [2, 32], strides = [1, 1]} : vector<2x128xf32> to vector<2x32xf32>
    %94 = vector.extract_strided_slice %92 {offsets = [0, 64], sizes = [2, 32], strides = [1, 1]} : vector<2x128xf32> to vector<2x32xf32>
    %95 = vector.extract_strided_slice %91 {offsets = [0, 96], sizes = [2, 32], strides = [1, 1]} : vector<2x128xf32> to vector<2x32xf32>
    %96 = vector.extract_strided_slice %91 {offsets = [0, 32], sizes = [2, 32], strides = [1, 1]} : vector<2x128xf32> to vector<2x32xf32>
    %97 = arith.mulf %96, %82 : vector<2x32xf32>
    %98 = arith.mulf %93, %94 : vector<2x32xf32>
    %99 = arith.addf %97, %98 : vector<2x32xf32>
    %100 = math.tanh %99 : vector<2x32xf32>
    %101 = arith.mulf %95, %100 : vector<2x32xf32>
    %cst_18 = arith.constant dense<0.000000e+00> : vector<2x128xf32>
    %102 = tpu.matmul %101, %0, %cst_18 {dimension_numbers = #tpu.dot_dimension_numbers<[1], [0], [0], [1], [0, 0, 1, 1], [], []>} : vector<2x32xf32>, vector<32x128xf32>, vector<2x128xf32> -> vector<2x128xf32>
    %103 = arith.addf %29, %102 : vector<2x128xf32>
    %104 = arith.negf %103 : vector<2x128xf32>
    %105 = math.exp %104 : vector<2x128xf32>
    %cst_19 = arith.constant 1.000000e+00 : f32
    %106 = vector.broadcast %cst_19 : f32 to vector<2x128xf32>
    %107 = arith.addf %106, %105 : vector<2x128xf32>
    %108 = arith.divf %106, %107 : vector<2x128xf32>
    %109 = math.tanh %103 : vector<2x128xf32>
    %110 = vector.extract_strided_slice %108 {offsets = [0, 0], sizes = [2, 32], strides = [1, 1]} : vector<2x128xf32> to vector<2x32xf32>
    %111 = vector.extract_strided_slice %109 {offsets = [0, 64], sizes = [2, 32], strides = [1, 1]} : vector<2x128xf32> to vector<2x32xf32>
    %112 = vector.extract_strided_slice %108 {offsets = [0, 96], sizes = [2, 32], strides = [1, 1]} : vector<2x128xf32> to vector<2x32xf32>
    %113 = vector.extract_strided_slice %108 {offsets = [0, 32], sizes = [2, 32], strides = [1, 1]} : vector<2x128xf32> to vector<2x32xf32>
    %114 = arith.mulf %113, %99 : vector<2x32xf32>
    %115 = arith.mulf %110, %111 : vector<2x32xf32>
    %116 = arith.addf %114, %115 : vector<2x32xf32>
    %117 = math.tanh %116 : vector<2x32xf32>
    %118 = arith.mulf %112, %117 : vector<2x32xf32>
    %cst_20 = arith.constant dense<0.000000e+00> : vector<2x128xf32>
    %119 = tpu.matmul %118, %0, %cst_20 {dimension_numbers = #tpu.dot_dimension_numbers<[1], [0], [0], [1], [0, 0, 1, 1], [], []>} : vector<2x32xf32>, vector<32x128xf32>, vector<2x128xf32> -> vector<2x128xf32>
    %120 = arith.addf %32, %119 : vector<2x128xf32>
    %121 = arith.negf %120 : vector<2x128xf32>
    %122 = math.exp %121 : vector<2x128xf32>
    %cst_21 = arith.constant 1.000000e+00 : f32
    %123 = vector.broadcast %cst_21 : f32 to vector<2x128xf32>
    %124 = arith.addf %123, %122 : vector<2x128xf32>
    %125 = arith.divf %123, %124 : vector<2x128xf32>
    %126 = math.tanh %120 : vector<2x128xf32>
    %127 = vector.extract_strided_slice %125 {offsets = [0, 0], sizes = [2, 32], strides = [1, 1]} : vector<2x128xf32> to vector<2x32xf32>
    %128 = vector.extract_strided_slice %126 {offsets = [0, 64], sizes = [2, 32], strides = [1, 1]} : vector<2x128xf32> to vector<2x32xf32>
    %129 = vector.extract_strided_slice %125 {offsets = [0, 96], sizes = [2, 32], strides = [1, 1]} : vector<2x128xf32> to vector<2x32xf32>
    %130 = vector.extract_strided_slice %125 {offsets = [0, 32], sizes = [2, 32], strides = [1, 1]} : vector<2x128xf32> to vector<2x32xf32>
    %131 = arith.mulf %130, %116 : vector<2x32xf32>
    %132 = arith.mulf %127, %128 : vector<2x32xf32>
    %133 = arith.addf %131, %132 : vector<2x32xf32>
    %134 = math.tanh %133 : vector<2x32xf32>
    %135 = arith.mulf %129, %134 : vector<2x32xf32>
    %cst_22 = arith.constant dense<0.000000e+00> : vector<2x128xf32>
    %136 = tpu.matmul %135, %0, %cst_22 {dimension_numbers = #tpu.dot_dimension_numbers<[1], [0], [0], [1], [0, 0, 1, 1], [], []>} : vector<2x32xf32>, vector<32x128xf32>, vector<2x128xf32> -> vector<2x128xf32>
    %137 = arith.addf %35, %136 : vector<2x128xf32>
    %138 = arith.negf %137 : vector<2x128xf32>
    %139 = math.exp %138 : vector<2x128xf32>
    %cst_23 = arith.constant 1.000000e+00 : f32
    %140 = vector.broadcast %cst_23 : f32 to vector<2x128xf32>
    %141 = arith.addf %140, %139 : vector<2x128xf32>
    %142 = arith.divf %140, %141 : vector<2x128xf32>
    %143 = math.tanh %137 : vector<2x128xf32>
    %144 = vector.extract_strided_slice %142 {offsets = [0, 0], sizes = [2, 32], strides = [1, 1]} : vector<2x128xf32> to vector<2x32xf32>
    %145 = vector.extract_strided_slice %143 {offsets = [0, 64], sizes = [2, 32], strides = [1, 1]} : vector<2x128xf32> to vector<2x32xf32>
    %146 = vector.extract_strided_slice %142 {offsets = [0, 96], sizes = [2, 32], strides = [1, 1]} : vector<2x128xf32> to vector<2x32xf32>
    %147 = vector.extract_strided_slice %142 {offsets = [0, 32], sizes = [2, 32], strides = [1, 1]} : vector<2x128xf32> to vector<2x32xf32>
    %148 = arith.mulf %147, %133 : vector<2x32xf32>
    %149 = arith.mulf %144, %145 : vector<2x32xf32>
    %150 = arith.addf %148, %149 : vector<2x32xf32>
    %151 = math.tanh %150 : vector<2x32xf32>
    %152 = arith.mulf %146, %151 : vector<2x32xf32>
    %cst_24 = arith.constant dense<0.000000e+00> : vector<2x128xf32>
    %153 = tpu.matmul %152, %0, %cst_24 {dimension_numbers = #tpu.dot_dimension_numbers<[1], [0], [0], [1], [0, 0, 1, 1], [], []>} : vector<2x32xf32>, vector<32x128xf32>, vector<2x128xf32> -> vector<2x128xf32>
    %154 = arith.addf %38, %153 : vector<2x128xf32>
    %155 = arith.negf %154 : vector<2x128xf32>
    %156 = math.exp %155 : vector<2x128xf32>
    %cst_25 = arith.constant 1.000000e+00 : f32
    %157 = vector.broadcast %cst_25 : f32 to vector<2x128xf32>
    %158 = arith.addf %157, %156 : vector<2x128xf32>
    %159 = arith.divf %157, %158 : vector<2x128xf32>
    %160 = math.tanh %154 : vector<2x128xf32>
    %161 = vector.extract_strided_slice %159 {offsets = [0, 0], sizes = [2, 32], strides = [1, 1]} : vector<2x128xf32> to vector<2x32xf32>
    %162 = vector.extract_strided_slice %160 {offsets = [0, 64], sizes = [2, 32], strides = [1, 1]} : vector<2x128xf32> to vector<2x32xf32>
    %163 = vector.extract_strided_slice %159 {offsets = [0, 96], sizes = [2, 32], strides = [1, 1]} : vector<2x128xf32> to vector<2x32xf32>
    %164 = vector.extract_strided_slice %159 {offsets = [0, 32], sizes = [2, 32], strides = [1, 1]} : vector<2x128xf32> to vector<2x32xf32>
    %165 = arith.mulf %164, %150 : vector<2x32xf32>
    %166 = arith.mulf %161, %162 : vector<2x32xf32>
    %167 = arith.addf %165, %166 : vector<2x32xf32>
    %168 = math.tanh %167 : vector<2x32xf32>
    %169 = arith.mulf %163, %168 : vector<2x32xf32>
    %170 = vector.broadcast %3 : vector<1x32xf32> to vector<2x32xf32>
    %171 = arith.mulf %169, %170 : vector<2x32xf32>
    %cst_26 = arith.constant dense<0.000000e+00> : vector<2xf32>
    %172 = vector.multi_reduction <add>, %171, %cst_26 [1] : vector<2x32xf32> to vector<2xf32>
    %173 = vector.shape_cast %172 : vector<2xf32> to vector<2x1xf32>
    %174 = vector.broadcast %4 : vector<1x1xf32> to vector<2x1xf32>
    %175 = arith.addf %173, %174 : vector<2x1xf32>
    %c0_27 = arith.constant 0 : index
    %c0_28 = arith.constant 0 : index
    %176 = vector.load %arg3[%c0_27, %c0_28] : memref<2x1xf32, #tpu.memory_space<vmem>>, vector<2x1xf32>
    tpu.vector_store %arg3[%c0_27, %c0_28], %175 {strides = array<i32>} : memref<2x1xf32, #tpu.memory_space<vmem>>, vector<2x1xf32>,
    return
  }
  func.func @transform_0(%arg0: i32) -> (i32, i32, i32) {
    %c0_i32 = arith.constant 0 : i32
    %c0_i32_0 = arith.constant 0 : i32
    %c0_i32_1 = arith.constant 0 : i32
    return %arg0, %c0_i32, %c0_i32_0 : i32, i32, i32
  }
  func.func @transform_1(%arg0: i32) -> (i32, i32) {
    %c0_i32 = arith.constant 0 : i32
    %c0_i32_0 = arith.constant 0 : i32
    %c0_i32_1 = arith.constant 0 : i32
    return %c0_i32, %c0_i32_0 : i32, i32
  }
  func.func @transform_2(%arg0: i32) -> (i32, i32) {
    %c0_i32 = arith.constant 0 : i32
    %c0_i32_0 = arith.constant 0 : i32
    return %arg0, %c0_i32 : i32, i32
  }
}

</mosaic_0001>

<llo_original>
// kernel: tpu_custom_call.1
$region0: #{tpu_custom_call.1}
  #allocation0 [shape = 'u32[]', space=smem, size = 0x4, offset = 0x4, fixed_abs, tag = 'smem constant byte address 0x4 - core index']
  #allocation1 [shape = 'u32[144,128]{1,0:T(1,128)}', space=vmem, size = 0x12000, scoped, tag = 'internal scratch']
  %s0 = inlined_call_operand.vmem [shape: f32[2,8,4], index: 0, kind: input, shape index: {}]
  %s1 = inlined_call_operand.hbm [shape: f32[40,128], index: 1, kind: input, shape index: {}]
  %s2 = inlined_call_operand.vmem [shape: f32[2,1], index: 2, kind: output, shape index: {}]
  %s3 = sld [smem:[#allocation0]]
  $region22: #{tpu_custom_call.1} parent=0
    _
  %s5 = ssub.s32 1, %s3
  %s6 = scalar_select 0, %s5, %s3
  $region1: #{tpu_custom_call.1} parent=0
    #allocation2 [shape = 'u8[20480]{0}', space=vmem, size = 0x5000, scoped, tag = 'input window, operand 1, single buffered']
    #allocation3 [shape = 's32[1]{0}', space=sflag, size = 0x4, scoped, tag = 'scoped memory for tpu_custom_call.1']
    %7 = vsyncpa [#allocation3], 0
    // Predicated region
    $region2: #{tpu_custom_call.1} parent=1 // pred_check
      _
    $region3: #{tpu_custom_call.1} parent=1 // pred_check_branch
      %9 = sbr.rel (0) target = $region5
    $region4: #{tpu_custom_call.1} parent=1 // pred_region
      _
    $region5: #{tpu_custom_call.1} parent=1 // pred_fallthru
      _
    // Predicated region
    $region6: #{tpu_custom_call.1} parent=1 // pred_check
      _
    $region7: #{tpu_custom_call.1} parent=1 // pred_check_branch
      %11 = sbr.rel (0) target = $region9
    $region8: #{tpu_custom_call.1} parent=1 // pred_region
      %s13 = ssub.s32 640, 640
      %14 = vsyncadd [#allocation3], %s13
      %s15 = sshll.u32 [#allocation2], 4
      %s16 = int_to_ptr.vmem [resolvable:$true] %s15
      %21 = dma.hbm_to_vmem [thread:$0]  %s1, 640, %s16, [#allocation3], 128, 128, 8
    $region9: #{tpu_custom_call.1} parent=1 // pred_fallthru
      _
    // Predicated region
    $region10: #{tpu_custom_call.1} parent=1 // pred_check
      _
    $region11: #{tpu_custom_call.1} parent=1 // pred_check_branch
      %23 = sbr.rel (0) target = $region13
    $region12: #{tpu_custom_call.1} parent=1 // pred_region
      %24 = dma.done [#allocation3], 640
    $region13: #{tpu_custom_call.1} parent=1 // pred_fallthru
      _
    %v25 = vld [vmem:[#allocation2] sm:$0xff]
    %v26 = vld [vmem:[#allocation2 + $0x8] sm:$0xff]
    %v27 = vld [vmem:[#allocation2 + $0x10] sm:$0xff]
    %v28 = vld [vmem:[#allocation2 + $0x18] sm:$0xff]
    %v29 = vld [vmem:[#allocation2 + $0x20] sm:$0xf]
    %v30 = vld [vmem:[#allocation2 + $0x24] sm:$0x1]
    %v31 = vld [vmem:[#allocation2 + $0x25] sm:$0x1]
    %v32 = vld [vmem:[#allocation2 + $0x26] sm:$0x1]
    %v33 = vld [vmem:[%s0] sm:$0xff]
    %v34 = vlaneseq
    %v35 = vshrl.u32 %v34, 7
    %v36 = vsub.s32 0, %v35
    %v37 = vrot.slane %v30, %v36
    %vm38 = vcmask 31744
    %v40 = vsel %vm38, %v33, 0
    %vm42 = vcmask 1043456
    %v44 = vsel %vm42, %v29, 0
    %46 = vmatprep.subr.mxu0 0.0
    %47 = vmatpush1.msra.mxu0 %v44
    %48 = vmatprep.subr.mxu0 0.0
    %49 = vmatpush1.msra.mxu0 0.0
    %50 = vmatprep.subr.mxu0 0.0
    %51 = vmatpush1.msra.mxu0 0.0
    %52 = vmatprep.subr.mxu0 0.0
    %53 = vmatpush1.msra.mxu0 0.0
    %54 = vmatprep.subr.mxu0 0.0
    %55 = vmatpush1.msra.mxu0 0.0
    %56 = vmatprep.subr.mxu0 0.0
    %57 = vmatpush1.msra.mxu0 0.0
    %58 = vmatprep.subr.mxu0 0.0
    %59 = vmatpush1.msra.mxu0 0.0
    %60 = vmatprep.subr.mxu0 0.0
    %61 = vmatpush1.msra.mxu0 0.0
    %62 = vmatprep.subr.mxu0 0.0
    %63 = vmatpush1.msra.mxu0 0.0
    %64 = vmatprep.subr.mxu0 0.0
    %65 = vmatpush1.msra.mxu0 0.0
    %66 = vmatprep.subr.mxu0 0.0
    %67 = vmatpush1.msra.mxu0 0.0
    %68 = vmatprep.subr.mxu0 0.0
    %69 = vmatpush1.msra.mxu0 0.0
    %70 = vmatprep.subr.mxu0 0.0
    %71 = vmatpush1.msra.mxu0 0.0
    %72 = vmatprep.subr.mxu0 0.0
    %73 = vmatpush1.msra.mxu0 0.0
    %74 = vmatprep.subr.mxu0 0.0
    %75 = vmatpush1.msra.mxu0 0.0
    %76 = vmatprep.subr.mxu0 0.0
    %77 = vmatpush1.msra.mxu0 0.0
    %78 = vmatprep.subr.mxu0 0.0
    %79 = vmatpush1.msra.mxu0 0.0
    %80 = vmatprep.subr.mxu0 0.0
    %81 = vmatpush1.msra.mxu0 0.0
    %82 = vmatprep.subr.mxu0 0.0
    %83 = vmatpush1.msra.mxu0 0.0
    %84 = vmatprep.subr.mxu0 0.0
    %85 = vmatpush1.msra.mxu0 0.0
    %86 = vmatprep.subr.mxu0 0.0
    %87 = vmatpush1.msra.mxu0 0.0
    %88 = vmatprep.subr.mxu0 0.0
    %89 = vmatpush1.msra.mxu0 0.0
    %90 = vmatprep.subr.mxu0 0.0
    %91 = vmatpush1.msra.mxu0 0.0
    %92 = vmatprep.subr.mxu0 0.0
    %93 = vmatpush1.msra.mxu0 0.0
    %94 = vmatprep.subr.mxu0 0.0
    %95 = vmatpush1.msra.mxu0 0.0
    %96 = vmatprep.subr.mxu0 0.0
    %97 = vmatpush1.msra.mxu0 0.0
    %98 = vmatprep.subr.mxu0 0.0
    %99 = vmatpush1.msra.mxu0 0.0
    %100 = vmatprep.subr.mxu0 0.0
    %101 = vmatpush1.msra.mxu0 0.0
    %102 = vmatprep.subr.mxu0 0.0
    %103 = vmatpush1.msra.mxu0 0.0
    %104 = vmatprep.subr.mxu0 0.0
    %105 = vmatpush1.msra.mxu0 0.0
    %106 = vmatprep.subr.mxu0 0.0
    %107 = vmatpush1.msra.mxu0 0.0
    %108 = vmatprep.subr.mxu0 0.0
    %109 = vmatpush1.msra.mxu0 0.0
    %110 = vmatprep.mubr.f32.mxu0 0.0
    %111 = vmatmul.mubr.f32.gmra.mrb[0].mxu0 %v40
    %v112 = vpop.f32.mrb[0].mxu0
    %v113 = vadd.f32 %v37, %v112
    %v114 = vpop.f32.mrb[0].mxu0
    %115 = vdwg.mxu0
    %s116 = scalar_lea.vmem %s0, 8
    %v117 = vld [vmem:[%s116] sm:$0xff]
    %v119 = vsel %vm38, %v117, 0
    %121 = vmatprep.subr.mxu0 0.0
    %122 = vmatpush1.msra.mxu0 %v44
    %123 = vmatprep.subr.mxu0 0.0
    %124 = vmatpush1.msra.mxu0 0.0
    %125 = vmatprep.subr.mxu0 0.0
    %126 = vmatpush1.msra.mxu0 0.0
    %127 = vmatprep.subr.mxu0 0.0
    %128 = vmatpush1.msra.mxu0 0.0
    %129 = vmatprep.subr.mxu0 0.0
    %130 = vmatpush1.msra.mxu0 0.0
    %131 = vmatprep.subr.mxu0 0.0
    %132 = vmatpush1.msra.mxu0 0.0
    %133 = vmatprep.subr.mxu0 0.0
    %134 = vmatpush1.msra.mxu0 0.0
    %135 = vmatprep.subr.mxu0 0.0
    %136 = vmatpush1.msra.mxu0 0.0
    %137 = vmatprep.subr.mxu0 0.0
    %138 = vmatpush1.msra.mxu0 0.0
    %139 = vmatprep.subr.mxu0 0.0
    %140 = vmatpush1.msra.mxu0 0.0
    %141 = vmatprep.subr.mxu0 0.0
    %142 = vmatpush1.msra.mxu0 0.0
    %143 = vmatprep.subr.mxu0 0.0
    %144 = vmatpush1.msra.mxu0 0.0
    %145 = vmatprep.subr.mxu0 0.0
    %146 = vmatpush1.msra.mxu0 0.0
    %147 = vmatprep.subr.mxu0 0.0
    %148 = vmatpush1.msra.mxu0 0.0
    %149 = vmatprep.subr.mxu0 0.0
    %150 = vmatpush1.msra.mxu0 0.0
    %151 = vmatprep.subr.mxu0 0.0
    %152 = vmatpush1.msra.mxu0 0.0
    %153 = vmatprep.subr.mxu0 0.0
    %154 = vmatpush1.msra.mxu0 0.0
    %155 = vmatprep.subr.mxu0 0.0
    %156 = vmatpush1.msra.mxu0 0.0
    %157 = vmatprep.subr.mxu0 0.0
    %158 = vmatpush1.msra.mxu0 0.0
    %159 = vmatprep.subr.mxu0 0.0
    %160 = vmatpush1.msra.mxu0 0.0
    %161 = vmatprep.subr.mxu0 0.0
    %162 = vmatpush1.msra.mxu0 0.0
    %163 = vmatprep.subr.mxu0 0.0
    %164 = vmatpush1.msra.mxu0 0.0
    %165 = vmatprep.subr.mxu0 0.0
    %166 = vmatpush1.msra.mxu0 0.0
    %167 = vmatprep.subr.mxu0 0.0
    %168 = vmatpush1.msra.mxu0 0.0
    %169 = vmatprep.subr.mxu0 0.0
    %170 = vmatpush1.msra.mxu0 0.0
    %171 = vmatprep.subr.mxu0 0.0
    %172 = vmatpush1.msra.mxu0 0.0
    %173 = vmatprep.subr.mxu0 0.0
    %174 = vmatpush1.msra.mxu0 0.0
    %175 = vmatprep.subr.mxu0 0.0
    %176 = vmatpush1.msra.mxu0 0.0
    %177 = vmatprep.subr.mxu0 0.0
    %178 = vmatpush1.msra.mxu0 0.0
    %179 = vmatprep.subr.mxu0 0.0
    %180 = vmatpush1.msra.mxu0 0.0
    %181 = vmatprep.subr.mxu0 0.0
    %182 = vmatpush1.msra.mxu0 0.0
    %183 = vmatprep.subr.mxu0 0.0
    %184 = vmatpush1.msra.mxu0 0.0
    %185 = vmatprep.mubr.f32.mxu0 0.0
    %186 = vmatmul.mubr.f32.gmra.mrb[0].mxu0 %v119
    %v187 = vpop.f32.mrb[0].mxu0
    %v188 = vadd.f32 %v37, %v187
    %v189 = vpop.f32.mrb[0].mxu0
    %190 = vdwg.mxu0
    %v192 = vrot.slane %v188, 7
    %vm194 = vcmask 1040384
    %v195 = vsel %vm194, %v113, %v192
    %v197 = vrot.slane %v113, 1
    %v199 = vsel %vm194, %v197, %v188
    %v200 = vrot.slane %v113, 2
    %v202 = vrot.slane %v188, 1
    %v204 = vsel %vm194, %v200, %v202
    %v205 = vrot.slane %v113, 3
    %v207 = vrot.slane %v188, 2
    %v209 = vsel %vm194, %v205, %v207
    %v210 = vrot.slane %v113, 4
    %v212 = vrot.slane %v188, 3
    %v214 = vsel %vm194, %v210, %v212
    %v215 = vrot.slane %v113, 5
    %v217 = vrot.slane %v188, 4
    %v219 = vsel %vm194, %v215, %v217
    %v220 = vrot.slane %v113, 6
    %v222 = vrot.slane %v188, 5
    %v224 = vsel %vm194, %v220, %v222
    %v225 = vrot.slane %v113, 7
    %v227 = vrot.slane %v188, 6
    %v229 = vsel %vm194, %v225, %v227
    %v230 = vxor.u32 %v195, 2147483648
    %v231 = vmul.f32 %v230, 1.442695
    %v232 = vpow.pop %v231
    %v233 = vadd.f32 %v232, 1.0
    %v234 = vrcp.pop %v233
    %v235 = vmul.f32 1.0, %v234
    %v236 = vtanh.pop %v195
    %238 = vrot.lane.b32.xlu0 %v236, 64
    %v239 = vpop.permute.xlu0 %238
    %v241 = vmul.f32 %v235, %v239
    %v242 = vtanh.pop %v241
    %244 = vrot.lane.b32.xlu0 %v242, 96
    %v245 = vpop.permute.xlu0 %244
    %v247 = vmul.f32 %v235, %v245
    %249 = vrot.lane.b32.xlu0 %v247, 32
    %v250 = vpop.permute.xlu0 %249
    %vm251 = vcmask 261120
    %v252 = vsel %vm251, %v250, 0
    %254 = vmatprep.subr.mxu0 0.0
    %255 = vmatpush1.msra.mxu0 %v25
    %256 = vmatprep.subr.mxu0 0.0
    %257 = vmatpush1.msra.mxu0 %v26
    %258 = vmatprep.subr.mxu0 0.0
    %259 = vmatpush1.msra.mxu0 %v27
    %260 = vmatprep.subr.mxu0 0.0
    %261 = vmatpush1.msra.mxu0 %v28
    %262 = vmatprep.subr.mxu0 0.0
    %263 = vmatpush1.msra.mxu0 0.0
    %264 = vmatprep.subr.mxu0 0.0
    %265 = vmatpush1.msra.mxu0 0.0
    %266 = vmatprep.subr.mxu0 0.0
    %267 = vmatpush1.msra.mxu0 0.0
    %268 = vmatprep.subr.mxu0 0.0
    %269 = vmatpush1.msra.mxu0 0.0
    %270 = vmatprep.subr.mxu0 0.0
    %271 = vmatpush1.msra.mxu0 0.0
    %272 = vmatprep.subr.mxu0 0.0
    %273 = vmatpush1.msra.mxu0 0.0
    %274 = vmatprep.subr.mxu0 0.0
    %275 = vmatpush1.msra.mxu0 0.0
    %276 = vmatprep.subr.mxu0 0.0
    %277 = vmatpush1.msra.mxu0 0.0
    %278 = vmatprep.subr.mxu0 0.0
    %279 = vmatpush1.msra.mxu0 0.0
    %280 = vmatprep.subr.mxu0 0.0
    %281 = vmatpush1.msra.mxu0 0.0
    %282 = vmatprep.subr.mxu0 0.0
    %283 = vmatpush1.msra.mxu0 0.0
    %284 = vmatprep.subr.mxu0 0.0
    %285 = vmatpush1.msra.mxu0 0.0
    %286 = vmatprep.subr.mxu0 0.0
    %287 = vmatpush1.msra.mxu0 0.0
    %288 = vmatprep.subr.mxu0 0.0
    %289 = vmatpush1.msra.mxu0 0.0
    %290 = vmatprep.subr.mxu0 0.0
    %291 = vmatpush1.msra.mxu0 0.0
    %292 = vmatprep.subr.mxu0 0.0
    %293 = vmatpush1.msra.mxu0 0.0
    %294 = vmatprep.subr.mxu0 0.0
    %295 = vmatpush1.msra.mxu0 0.0
    %296 = vmatprep.subr.mxu0 0.0
    %297 = vmatpush1.msra.mxu0 0.0
    %298 = vmatprep.subr.mxu0 0.0
    %299 = vmatpush1.msra.mxu0 0.0
    %300 = vmatprep.subr.mxu0 0.0
    %301 = vmatpush1.msra.mxu0 0.0
    %302 = vmatprep.subr.mxu0 0.0
    %303 = vmatpush1.msra.mxu0 0.0
    %304 = vmatprep.subr.mxu0 0.0
    %305 = vmatpush1.msra.mxu0 0.0
    %306 = vmatprep.subr.mxu0 0.0
    %307 = vmatpush1.msra.mxu0 0.0
    %308 = vmatprep.subr.mxu0 0.0
    %309 = vmatpush1.msra.mxu0 0.0
    %310 = vmatprep.subr.mxu0 0.0
    %311 = vmatpush1.msra.mxu0 0.0
    %312 = vmatprep.subr.mxu0 0.0
    %313 = vmatpush1.msra.mxu0 0.0
    %314 = vmatprep.subr.mxu0 0.0
    %315 = vmatpush1.msra.mxu0 0.0
    %316 = vmatprep.subr.mxu0 0.0
    %317 = vmatpush1.msra.mxu0 0.0
    %318 = vmatprep.mubr.f32.mxu0 0.0
    %319 = vmatmul.mubr.f32.gmra.mrb[0].mxu0 %v252
    %v320 = vpop.f32.mrb[0].mxu0
    %v321 = vadd.f32 0.0, %v320
    %v322 = vpop.f32.mrb[0].mxu0
    %323 = vdwg.mxu0
    %v324 = vadd.f32 %v199, %v321
    %v325 = vxor.u32 %v324, 2147483648
    %v326 = vmul.f32 %v325, 1.442695
    %v327 = vpow.pop %v326
    %v328 = vadd.f32 %v327, 1.0
    %v329 = vrcp.pop %v328
    %v330 = vmul.f32 1.0, %v329
    %v331 = vtanh.pop %v324
    %333 = vrot.lane.b32.xlu0 %v241, 32
    %v334 = vpop.permute.xlu0 %333
    %v336 = vmul.f32 %v330, %v334
    %338 = vrot.lane.b32.xlu0 %v331, 64
    %v339 = vpop.permute.xlu0 %338
    %v341 = vmul.f32 %v330, %v339
    %343 = vrot.lane.b32.xlu0 %v341, 32
    %v344 = vpop.permute.xlu0 %343
    %v346 = vadd.f32 %v336, %v344
    %v347 = vtanh.pop %v346
    %349 = vrot.lane.b32.xlu0 %v347, 64
    %v350 = vpop.permute.xlu0 %349
    %v352 = vmul.f32 %v330, %v350
    %354 = vrot.lane.b32.xlu0 %v352, 32
    %v355 = vpop.permute.xlu0 %354
    %v356 = vsel %vm251, %v355, 0
    %358 = vmatprep.subr.mxu0 0.0
    %359 = vmatpush1.msra.mxu0 %v25
    %360 = vmatprep.subr.mxu0 0.0
    %361 = vmatpush1.msra.mxu0 %v26
    %362 = vmatprep.subr.mxu0 0.0
    %363 = vmatpush1.msra.mxu0 %v27
    %364 = vmatprep.subr.mxu0 0.0
    %365 = vmatpush1.msra.mxu0 %v28
    %366 = vmatprep.subr.mxu0 0.0
    %367 = vmatpush1.msra.mxu0 0.0
    %368 = vmatprep.subr.mxu0 0.0
    %369 = vmatpush1.msra.mxu0 0.0
    %370 = vmatprep.subr.mxu0 0.0
    %371 = vmatpush1.msra.mxu0 0.0
    %372 = vmatprep.subr.mxu0 0.0
    %373 = vmatpush1.msra.mxu0 0.0
    %374 = vmatprep.subr.mxu0 0.0
    %375 = vmatpush1.msra.mxu0 0.0
    %376 = vmatprep.subr.mxu0 0.0
    %377 = vmatpush1.msra.mxu0 0.0
    %378 = vmatprep.subr.mxu0 0.0
    %379 = vmatpush1.msra.mxu0 0.0
    %380 = vmatprep.subr.mxu0 0.0
    %381 = vmatpush1.msra.mxu0 0.0
    %382 = vmatprep.subr.mxu0 0.0
    %383 = vmatpush1.msra.mxu0 0.0
    %384 = vmatprep.subr.mxu0 0.0
    %385 = vmatpush1.msra.mxu0 0.0
    %386 = vmatprep.subr.mxu0 0.0
    %387 = vmatpush1.msra.mxu0 0.0
    %388 = vmatprep.subr.mxu0 0.0
    %389 = vmatpush1.msra.mxu0 0.0
    %390 = vmatprep.subr.mxu0 0.0
    %391 = vmatpush1.msra.mxu0 0.0
    %392 = vmatprep.subr.mxu0 0.0
    %393 = vmatpush1.msra.mxu0 0.0
    %394 = vmatprep.subr.mxu0 0.0
    %395 = vmatpush1.msra.mxu0 0.0
    %396 = vmatprep.subr.mxu0 0.0
    %397 = vmatpush1.msra.mxu0 0.0
    %398 = vmatprep.subr.mxu0 0.0
    %399 = vmatpush1.msra.mxu0 0.0
    %400 = vmatprep.subr.mxu0 0.0
    %401 = vmatpush1.msra.mxu0 0.0
    %402 = vmatprep.subr.mxu0 0.0
    %403 = vmatpush1.msra.mxu0 0.0
    %404 = vmatprep.subr.mxu0 0.0
    %405 = vmatpush1.msra.mxu0 0.0
    %406 = vmatprep.subr.mxu0 0.0
    %407 = vmatpush1.msra.mxu0 0.0
    %408 = vmatprep.subr.mxu0 0.0
    %409 = vmatpush1.msra.mxu0 0.0
    %410 = vmatprep.subr.mxu0 0.0
    %411 = vmatpush1.msra.mxu0 0.0
    %412 = vmatprep.subr.mxu0 0.0
    %413 = vmatpush1.msra.mxu0 0.0
    %414 = vmatprep.subr.mxu0 0.0
    %415 = vmatpush1.msra.mxu0 0.0
    %416 = vmatprep.subr.mxu0 0.0
    %417 = vmatpush1.msra.mxu0 0.0
    %418 = vmatprep.subr.mxu0 0.0
    %419 = vmatpush1.msra.mxu0 0.0
    %420 = vmatprep.subr.mxu0 0.0
    %421 = vmatpush1.msra.mxu0 0.0
    %422 = vmatprep.mubr.f32.mxu0 0.0
    %423 = vmatmul.mubr.f32.gmra.mrb[0].mxu0 %v356
    %v424 = vpop.f32.mrb[0].mxu0
    %v425 = vadd.f32 0.0, %v424
    %v426 = vpop.f32.mrb[0].mxu0
    %427 = vdwg.mxu0
    %v428 = vadd.f32 %v204, %v425
    %v429 = vxor.u32 %v428, 2147483648
    %v430 = vmul.f32 %v429, 1.442695
    %v431 = vpow.pop %v430
    %v432 = vadd.f32 %v431, 1.0
    %v433 = vrcp.pop %v432
    %v434 = vmul.f32 1.0, %v433
    %v435 = vtanh.pop %v428
    %v436 = vmul.f32 %v434, %v346
    %438 = vrot.lane.b32.xlu0 %v435, 64
    %v439 = vpop.permute.xlu0 %438
    %v441 = vmul.f32 %v434, %v439
    %443 = vrot.lane.b32.xlu0 %v441, 32
    %v444 = vpop.permute.xlu0 %443
    %v446 = vadd.f32 %v436, %v444
    %v447 = vtanh.pop %v446
    %449 = vrot.lane.b32.xlu0 %v447, 64
    %v450 = vpop.permute.xlu0 %449
    %v452 = vmul.f32 %v434, %v450
    %454 = vrot.lane.b32.xlu0 %v452, 32
    %v455 = vpop.permute.xlu0 %454
    %v456 = vsel %vm251, %v455, 0
    %458 = vmatprep.subr.mxu0 0.0
    %459 = vmatpush1.msra.mxu0 %v25
    %460 = vmatprep.subr.mxu0 0.0
    %461 = vmatpush1.msra.mxu0 %v26
    %462 = vmatprep.subr.mxu0 0.0
    %463 = vmatpush1.msra.mxu0 %v27
    %464 = vmatprep.subr.mxu0 0.0
    %465 = vmatpush1.msra.mxu0 %v28
    %466 = vmatprep.subr.mxu0 0.0
    %467 = vmatpush1.msra.mxu0 0.0
    %468 = vmatprep.subr.mxu0 0.0
    %469 = vmatpush1.msra.mxu0 0.0
    %470 = vmatprep.subr.mxu0 0.0
    %471 = vmatpush1.msra.mxu0 0.0
    %472 = vmatprep.subr.mxu0 0.0
    %473 = vmatpush1.msra.mxu0 0.0
    %474 = vmatprep.subr.mxu0 0.0
    %475 = vmatpush1.msra.mxu0 0.0
    %476 = vmatprep.subr.mxu0 0.0
    %477 = vmatpush1.msra.mxu0 0.0
    %478 = vmatprep.subr.mxu0 0.0
    %479 = vmatpush1.msra.mxu0 0.0
    %480 = vmatprep.subr.mxu0 0.0
    %481 = vmatpush1.msra.mxu0 0.0
    %482 = vmatprep.subr.mxu0 0.0
    %483 = vmatpush1.msra.mxu0 0.0
    %484 = vmatprep.subr.mxu0 0.0
    %485 = vmatpush1.msra.mxu0 0.0
    %486 = vmatprep.subr.mxu0 0.0
    %487 = vmatpush1.msra.mxu0 0.0
    %488 = vmatprep.subr.mxu0 0.0
    %489 = vmatpush1.msra.mxu0 0.0
    %490 = vmatprep.subr.mxu0 0.0
    %491 = vmatpush1.msra.mxu0 0.0
    %492 = vmatprep.subr.mxu0 0.0
    %493 = vmatpush1.msra.mxu0 0.0
    %494 = vmatprep.subr.mxu0 0.0
    %495 = vmatpush1.msra.mxu0 0.0
    %496 = vmatprep.subr.mxu0 0.0
    %497 = vmatpush1.msra.mxu0 0.0
    %498 = vmatprep.subr.mxu0 0.0
    %499 = vmatpush1.msra.mxu0 0.0
    %500 = vmatprep.subr.mxu0 0.0
    %501 = vmatpush1.msra.mxu0 0.0
    %502 = vmatprep.subr.mxu0 0.0
    %503 = vmatpush1.msra.mxu0 0.0
    %504 = vmatprep.subr.mxu0 0.0
    %505 = vmatpush1.msra.mxu0 0.0
    %506 = vmatprep.subr.mxu0 0.0
    %507 = vmatpush1.msra.mxu0 0.0
    %508 = vmatprep.subr.mxu0 0.0
    %509 = vmatpush1.msra.mxu0 0.0
    %510 = vmatprep.subr.mxu0 0.0
    %511 = vmatpush1.msra.mxu0 0.0
    %512 = vmatprep.subr.mxu0 0.0
    %513 = vmatpush1.msra.mxu0 0.0
    %514 = vmatprep.subr.mxu0 0.0
    %515 = vmatpush1.msra.mxu0 0.0
    %516 = vmatprep.subr.mxu0 0.0
    %517 = vmatpush1.msra.mxu0 0.0
    %518 = vmatprep.subr.mxu0 0.0
    %519 = vmatpush1.msra.mxu0 0.0
    %520 = vmatprep.subr.mxu0 0.0
    %521 = vmatpush1.msra.mxu0 0.0
    %522 = vmatprep.mubr.f32.mxu0 0.0
    %523 = vmatmul.mubr.f32.gmra.mrb[0].mxu0 %v456
    %v524 = vpop.f32.mrb[0].mxu0
    %v525 = vadd.f32 0.0, %v524
    %v526 = vpop.f32.mrb[0].mxu0
    %527 = vdwg.mxu0
    %v528 = vadd.f32 %v209, %v525
    %v529 = vxor.u32 %v528, 2147483648
    %v530 = vmul.f32 %v529, 1.442695
    %v531 = vpow.pop %v530
    %v532 = vadd.f32 %v531, 1.0
    %v533 = vrcp.pop %v532
    %v534 = vmul.f32 1.0, %v533
    %v535 = vtanh.pop %v528
    %v536 = vmul.f32 %v534, %v446
    %538 = vrot.lane.b32.xlu0 %v535, 64
    %v539 = vpop.permute.xlu0 %538
    %v541 = vmul.f32 %v534, %v539
    %543 = vrot.lane.b32.xlu0 %v541, 32
    %v544 = vpop.permute.xlu0 %543
    %v546 = vadd.f32 %v536, %v544
    %v547 = vtanh.pop %v546
    %549 = vrot.lane.b32.xlu0 %v547, 64
    %v550 = vpop.permute.xlu0 %549
    %v552 = vmul.f32 %v534, %v550
    %554 = vrot.lane.b32.xlu0 %v552, 32
    %v555 = vpop.permute.xlu0 %554
    %v556 = vsel %vm251, %v555, 0
    %558 = vmatprep.subr.mxu0 0.0
    %559 = vmatpush1.msra.mxu0 %v25
    %560 = vmatprep.subr.mxu0 0.0
    %561 = vmatpush1.msra.mxu0 %v26
    %562 = vmatprep.subr.mxu0 0.0
    %563 = vmatpush1.msra.mxu0 %v27
    %564 = vmatprep.subr.mxu0 0.0
    %565 = vmatpush1.msra.mxu0 %v28
    %566 = vmatprep.subr.mxu0 0.0
    %567 = vmatpush1.msra.mxu0 0.0
    %568 = vmatprep.subr.mxu0 0.0
    %569 = vmatpush1.msra.mxu0 0.0
    %570 = vmatprep.subr.mxu0 0.0
    %571 = vmatpush1.msra.mxu0 0.0
    %572 = vmatprep.subr.mxu0 0.0
    %573 = vmatpush1.msra.mxu0 0.0
    %574 = vmatprep.subr.mxu0 0.0
    %575 = vmatpush1.msra.mxu0 0.0
    %576 = vmatprep.subr.mxu0 0.0
    %577 = vmatpush1.msra.mxu0 0.0
    %578 = vmatprep.subr.mxu0 0.0
    %579 = vmatpush1.msra.mxu0 0.0
    %580 = vmatprep.subr.mxu0 0.0
    %581 = vmatpush1.msra.mxu0 0.0
    %582 = vmatprep.subr.mxu0 0.0
    %583 = vmatpush1.msra.mxu0 0.0
    %584 = vmatprep.subr.mxu0 0.0
    %585 = vmatpush1.msra.mxu0 0.0
    %586 = vmatprep.subr.mxu0 0.0
    %587 = vmatpush1.msra.mxu0 0.0
    %588 = vmatprep.subr.mxu0 0.0
    %589 = vmatpush1.msra.mxu0 0.0
    %590 = vmatprep.subr.mxu0 0.0
    %591 = vmatpush1.msra.mxu0 0.0
    %592 = vmatprep.subr.mxu0 0.0
    %593 = vmatpush1.msra.mxu0 0.0
    %594 = vmatprep.subr.mxu0 0.0
    %595 = vmatpush1.msra.mxu0 0.0
    %596 = vmatprep.subr.mxu0 0.0
    %597 = vmatpush1.msra.mxu0 0.0
    %598 = vmatprep.subr.mxu0 0.0
    %599 = vmatpush1.msra.mxu0 0.0
    %600 = vmatprep.subr.mxu0 0.0
    %601 = vmatpush1.msra.mxu0 0.0
    %602 = vmatprep.subr.mxu0 0.0
    %603 = vmatpush1.msra.mxu0 0.0
    %604 = vmatprep.subr.mxu0 0.0
    %605 = vmatpush1.msra.mxu0 0.0
    %606 = vmatprep.subr.mxu0 0.0
    %607 = vmatpush1.msra.mxu0 0.0
    %608 = vmatprep.subr.mxu0 0.0
    %609 = vmatpush1.msra.mxu0 0.0
    %610 = vmatprep.subr.mxu0 0.0
    %611 = vmatpush1.msra.mxu0 0.0
    %612 = vmatprep.subr.mxu0 0.0
    %613 = vmatpush1.msra.mxu0 0.0
    %614 = vmatprep.subr.mxu0 0.0
    %615 = vmatpush1.msra.mxu0 0.0
    %616 = vmatprep.subr.mxu0 0.0
    %617 = vmatpush1.msra.mxu0 0.0
    %618 = vmatprep.subr.mxu0 0.0
    %619 = vmatpush1.msra.mxu0 0.0
    %620 = vmatprep.subr.mxu0 0.0
    %621 = vmatpush1.msra.mxu0 0.0
    %622 = vmatprep.mubr.f32.mxu0 0.0
    %623 = vmatmul.mubr.f32.gmra.mrb[0].mxu0 %v556
    %v624 = vpop.f32.mrb[0].mxu0
    %v625 = vadd.f32 0.0, %v624
    %v626 = vpop.f32.mrb[0].mxu0
    %627 = vdwg.mxu0
    %v628 = vadd.f32 %v214, %v625
    %v629 = vxor.u32 %v628, 2147483648
    %v630 = vmul.f32 %v629, 1.442695
    %v631 = vpow.pop %v630
    %v632 = vadd.f32 %v631, 1.0
    %v633 = vrcp.pop %v632
    %v634 = vmul.f32 1.0, %v633
    %v635 = vtanh.pop %v628
    %v636 = vmul.f32 %v634, %v546
    %638 = vrot.lane.b32.xlu0 %v635, 64
    %v639 = vpop.permute.xlu0 %638
    %v641 = vmul.f32 %v634, %v639
    %643 = vrot.lane.b32.xlu0 %v641, 32
    %v644 = vpop.permute.xlu0 %643
    %v646 = vadd.f32 %v636, %v644
    %v647 = vtanh.pop %v646
    %649 = vrot.lane.b32.xlu0 %v647, 64
    %v650 = vpop.permute.xlu0 %649
    %v652 = vmul.f32 %v634, %v650
    %654 = vrot.lane.b32.xlu0 %v652, 32
    %v655 = vpop.permute.xlu0 %654
    %v656 = vsel %vm251, %v655, 0
    %658 = vmatprep.subr.mxu0 0.0
    %659 = vmatpush1.msra.mxu0 %v25
    %660 = vmatprep.subr.mxu0 0.0
    %661 = vmatpush1.msra.mxu0 %v26
    %662 = vmatprep.subr.mxu0 0.0
    %663 = vmatpush1.msra.mxu0 %v27
    %664 = vmatprep.subr.mxu0 0.0
    %665 = vmatpush1.msra.mxu0 %v28
    %666 = vmatprep.subr.mxu0 0.0
    %667 = vmatpush1.msra.mxu0 0.0
    %668 = vmatprep.subr.mxu0 0.0
    %669 = vmatpush1.msra.mxu0 0.0
    %670 = vmatprep.subr.mxu0 0.0
    %671 = vmatpush1.msra.mxu0 0.0
    %672 = vmatprep.subr.mxu0 0.0
    %673 = vmatpush1.msra.mxu0 0.0
    %674 = vmatprep.subr.mxu0 0.0
    %675 = vmatpush1.msra.mxu0 0.0
    %676 = vmatprep.subr.mxu0 0.0
    %677 = vmatpush1.msra.mxu0 0.0
    %678 = vmatprep.subr.mxu0 0.0
    %679 = vmatpush1.msra.mxu0 0.0
    %680 = vmatprep.subr.mxu0 0.0
    %681 = vmatpush1.msra.mxu0 0.0
    %682 = vmatprep.subr.mxu0 0.0
    %683 = vmatpush1.msra.mxu0 0.0
    %684 = vmatprep.subr.mxu0 0.0
    %685 = vmatpush1.msra.mxu0 0.0
    %686 = vmatprep.subr.mxu0 0.0
    %687 = vmatpush1.msra.mxu0 0.0
    %688 = vmatprep.subr.mxu0 0.0
    %689 = vmatpush1.msra.mxu0 0.0
    %690 = vmatprep.subr.mxu0 0.0
    %691 = vmatpush1.msra.mxu0 0.0
    %692 = vmatprep.subr.mxu0 0.0
    %693 = vmatpush1.msra.mxu0 0.0
    %694 = vmatprep.subr.mxu0 0.0
    %695 = vmatpush1.msra.mxu0 0.0
    %696 = vmatprep.subr.mxu0 0.0
    %697 = vmatpush1.msra.mxu0 0.0
    %698 = vmatprep.subr.mxu0 0.0
    %699 = vmatpush1.msra.mxu0 0.0
    %700 = vmatprep.subr.mxu0 0.0
    %701 = vmatpush1.msra.mxu0 0.0
    %702 = vmatprep.subr.mxu0 0.0
    %703 = vmatpush1.msra.mxu0 0.0
    %704 = vmatprep.subr.mxu0 0.0
    %705 = vmatpush1.msra.mxu0 0.0
    %706 = vmatprep.subr.mxu0 0.0
    %707 = vmatpush1.msra.mxu0 0.0
    %708 = vmatprep.subr.mxu0 0.0
    %709 = vmatpush1.msra.mxu0 0.0
    %710 = vmatprep.subr.mxu0 0.0
    %711 = vmatpush1.msra.mxu0 0.0
    %712 = vmatprep.subr.mxu0 0.0
    %713 = vmatpush1.msra.mxu0 0.0
    %714 = vmatprep.subr.mxu0 0.0
    %715 = vmatpush1.msra.mxu0 0.0
    %716 = vmatprep.subr.mxu0 0.0
    %717 = vmatpush1.msra.mxu0 0.0
    %718 = vmatprep.subr.mxu0 0.0
    %719 = vmatpush1.msra.mxu0 0.0
    %720 = vmatprep.subr.mxu0 0.0
    %721 = vmatpush1.msra.mxu0 0.0
    %722 = vmatprep.mubr.f32.mxu0 0.0
    %723 = vmatmul.mubr.f32.gmra.mrb[0].mxu0 %v656
    %v724 = vpop.f32.mrb[0].mxu0
    %v725 = vadd.f32 0.0, %v724
    %v726 = vpop.f32.mrb[0].mxu0
    %727 = vdwg.mxu0
    %v728 = vadd.f32 %v219, %v725
    %v729 = vxor.u32 %v728, 2147483648
    %v730 = vmul.f32 %v729, 1.442695
    %v731 = vpow.pop %v730
    %v732 = vadd.f32 %v731, 1.0
    %v733 = vrcp.pop %v732
    %v734 = vmul.f32 1.0, %v733
    %v735 = vtanh.pop %v728
    %v736 = vmul.f32 %v734, %v646
    %738 = vrot.lane.b32.xlu0 %v735, 64
    %v739 = vpop.permute.xlu0 %738
    %v741 = vmul.f32 %v734, %v739
    %743 = vrot.lane.b32.xlu0 %v741, 32
    %v744 = vpop.permute.xlu0 %743
    %v746 = vadd.f32 %v736, %v744
    %v747 = vtanh.pop %v746
    %749 = vrot.lane.b32.xlu0 %v747, 64
    %v750 = vpop.permute.xlu0 %749
    %v752 = vmul.f32 %v734, %v750
    %754 = vrot.lane.b32.xlu0 %v752, 32
    %v755 = vpop.permute.xlu0 %754
    %v756 = vsel %vm251, %v755, 0
    %758 = vmatprep.subr.mxu0 0.0
    %759 = vmatpush1.msra.mxu0 %v25
    %760 = vmatprep.subr.mxu0 0.0
    %761 = vmatpush1.msra.mxu0 %v26
    %762 = vmatprep.subr.mxu0 0.0
    %763 = vmatpush1.msra.mxu0 %v27
    %764 = vmatprep.subr.mxu0 0.0
    %765 = vmatpush1.msra.mxu0 %v28
    %766 = vmatprep.subr.mxu0 0.0
    %767 = vmatpush1.msra.mxu0 0.0
    %768 = vmatprep.subr.mxu0 0.0
    %769 = vmatpush1.msra.mxu0 0.0
    %770 = vmatprep.subr.mxu0 0.0
    %771 = vmatpush1.msra.mxu0 0.0
    %772 = vmatprep.subr.mxu0 0.0
    %773 = vmatpush1.msra.mxu0 0.0
    %774 = vmatprep.subr.mxu0 0.0
    %775 = vmatpush1.msra.mxu0 0.0
    %776 = vmatprep.subr.mxu0 0.0
    %777 = vmatpush1.msra.mxu0 0.0
    %778 = vmatprep.subr.mxu0 0.0
    %779 = vmatpush1.msra.mxu0 0.0
    %780 = vmatprep.subr.mxu0 0.0
    %781 = vmatpush1.msra.mxu0 0.0
    %782 = vmatprep.subr.mxu0 0.0
    %783 = vmatpush1.msra.mxu0 0.0
    %784 = vmatprep.subr.mxu0 0.0
    %785 = vmatpush1.msra.mxu0 0.0
    %786 = vmatprep.subr.mxu0 0.0
    %787 = vmatpush1.msra.mxu0 0.0
    %788 = vmatprep.subr.mxu0 0.0
    %789 = vmatpush1.msra.mxu0 0.0
    %790 = vmatprep.subr.mxu0 0.0
    %791 = vmatpush1.msra.mxu0 0.0
    %792 = vmatprep.subr.mxu0 0.0
    %793 = vmatpush1.msra.mxu0 0.0
    %794 = vmatprep.subr.mxu0 0.0
    %795 = vmatpush1.msra.mxu0 0.0
    %796 = vmatprep.subr.mxu0 0.0
    %797 = vmatpush1.msra.mxu0 0.0
    %798 = vmatprep.subr.mxu0 0.0
    %799 = vmatpush1.msra.mxu0 0.0
    %800 = vmatprep.subr.mxu0 0.0
    %801 = vmatpush1.msra.mxu0 0.0
    %802 = vmatprep.subr.mxu0 0.0
    %803 = vmatpush1.msra.mxu0 0.0
    %804 = vmatprep.subr.mxu0 0.0
    %805 = vmatpush1.msra.mxu0 0.0
    %806 = vmatprep.subr.mxu0 0.0
    %807 = vmatpush1.msra.mxu0 0.0
    %808 = vmatprep.subr.mxu0 0.0
    %809 = vmatpush1.msra.mxu0 0.0
    %810 = vmatprep.subr.mxu0 0.0
    %811 = vmatpush1.msra.mxu0 0.0
    %812 = vmatprep.subr.mxu0 0.0
    %813 = vmatpush1.msra.mxu0 0.0
    %814 = vmatprep.subr.mxu0 0.0
    %815 = vmatpush1.msra.mxu0 0.0
    %816 = vmatprep.subr.mxu0 0.0
    %817 = vmatpush1.msra.mxu0 0.0
    %818 = vmatprep.subr.mxu0 0.0
    %819 = vmatpush1.msra.mxu0 0.0
    %820 = vmatprep.subr.mxu0 0.0
    %821 = vmatpush1.msra.mxu0 0.0
    %822 = vmatprep.mubr.f32.mxu0 0.0
    %823 = vmatmul.mubr.f32.gmra.mrb[0].mxu0 %v756
    %v824 = vpop.f32.mrb[0].mxu0
    %v825 = vadd.f32 0.0, %v824
    %v826 = vpop.f32.mrb[0].mxu0
    %827 = vdwg.mxu0
    %v828 = vadd.f32 %v224, %v825
    %v829 = vxor.u32 %v828, 2147483648
    %v830 = vmul.f32 %v829, 1.442695
    %v831 = vpow.pop %v830
    %v832 = vadd.f32 %v831, 1.0
    %v833 = vrcp.pop %v832
    %v834 = vmul.f32 1.0, %v833
    %v835 = vtanh.pop %v828
    %v836 = vmul.f32 %v834, %v746
    %838 = vrot.lane.b32.xlu0 %v835, 64
    %v839 = vpop.permute.xlu0 %838
    %v841 = vmul.f32 %v834, %v839
    %843 = vrot.lane.b32.xlu0 %v841, 32
    %v844 = vpop.permute.xlu0 %843
    %v846 = vadd.f32 %v836, %v844
    %v847 = vtanh.pop %v846
    %849 = vrot.lane.b32.xlu0 %v847, 64
    %v850 = vpop.permute.xlu0 %849
    %v852 = vmul.f32 %v834, %v850
    %854 = vrot.lane.b32.xlu0 %v852, 32
    %v855 = vpop.permute.xlu0 %854
    %v856 = vsel %vm251, %v855, 0
    %858 = vmatprep.subr.mxu0 0.0
    %859 = vmatpush1.msra.mxu0 %v25
    %860 = vmatprep.subr.mxu0 0.0
    %861 = vmatpush1.msra.mxu0 %v26
    %862 = vmatprep.subr.mxu0 0.0
    %863 = vmatpush1.msra.mxu0 %v27
    %864 = vmatprep.subr.mxu0 0.0
    %865 = vmatpush1.msra.mxu0 %v28
    %866 = vmatprep.subr.mxu0 0.0
    %867 = vmatpush1.msra.mxu0 0.0
    %868 = vmatprep.subr.mxu0 0.0
    %869 = vmatpush1.msra.mxu0 0.0
    %870 = vmatprep.subr.mxu0 0.0
    %871 = vmatpush1.msra.mxu0 0.0
    %872 = vmatprep.subr.mxu0 0.0
    %873 = vmatpush1.msra.mxu0 0.0
    %874 = vmatprep.subr.mxu0 0.0
    %875 = vmatpush1.msra.mxu0 0.0
    %876 = vmatprep.subr.mxu0 0.0
    %877 = vmatpush1.msra.mxu0 0.0
    %878 = vmatprep.subr.mxu0 0.0
    %879 = vmatpush1.msra.mxu0 0.0
    %880 = vmatprep.subr.mxu0 0.0
    %881 = vmatpush1.msra.mxu0 0.0
    %882 = vmatprep.subr.mxu0 0.0
    %883 = vmatpush1.msra.mxu0 0.0
    %884 = vmatprep.subr.mxu0 0.0
    %885 = vmatpush1.msra.mxu0 0.0
    %886 = vmatprep.subr.mxu0 0.0
    %887 = vmatpush1.msra.mxu0 0.0
    %888 = vmatprep.subr.mxu0 0.0
    %889 = vmatpush1.msra.mxu0 0.0
    %890 = vmatprep.subr.mxu0 0.0
    %891 = vmatpush1.msra.mxu0 0.0
    %892 = vmatprep.subr.mxu0 0.0
    %893 = vmatpush1.msra.mxu0 0.0
    %894 = vmatprep.subr.mxu0 0.0
    %895 = vmatpush1.msra.mxu0 0.0
    %896 = vmatprep.subr.mxu0 0.0
    %897 = vmatpush1.msra.mxu0 0.0
    %898 = vmatprep.subr.mxu0 0.0
    %899 = vmatpush1.msra.mxu0 0.0
    %900 = vmatprep.subr.mxu0 0.0
    %901 = vmatpush1.msra.mxu0 0.0
    %902 = vmatprep.subr.mxu0 0.0
    %903 = vmatpush1.msra.mxu0 0.0
    %904 = vmatprep.subr.mxu0 0.0
    %905 = vmatpush1.msra.mxu0 0.0
    %906 = vmatprep.subr.mxu0 0.0
    %907 = vmatpush1.msra.mxu0 0.0
    %908 = vmatprep.subr.mxu0 0.0
    %909 = vmatpush1.msra.mxu0 0.0
    %910 = vmatprep.subr.mxu0 0.0
    %911 = vmatpush1.msra.mxu0 0.0
    %912 = vmatprep.subr.mxu0 0.0
    %913 = vmatpush1.msra.mxu0 0.0
    %914 = vmatprep.subr.mxu0 0.0
    %915 = vmatpush1.msra.mxu0 0.0
    %916 = vmatprep.subr.mxu0 0.0
    %917 = vmatpush1.msra.mxu0 0.0
    %918 = vmatprep.subr.mxu0 0.0
    %919 = vmatpush1.msra.mxu0 0.0
    %920 = vmatprep.subr.mxu0 0.0
    %921 = vmatpush1.msra.mxu0 0.0
    %922 = vmatprep.mubr.f32.mxu0 0.0
    %923 = vmatmul.mubr.f32.gmra.mrb[0].mxu0 %v856
    %v924 = vpop.f32.mrb[0].mxu0
    %v925 = vadd.f32 0.0, %v924
    %v926 = vpop.f32.mrb[0].mxu0
    %927 = vdwg.mxu0
    %v928 = vadd.f32 %v229, %v925
    %v929 = vxor.u32 %v928, 2147483648
    %v930 = vmul.f32 %v929, 1.442695
    %v931 = vpow.pop %v930
    %v932 = vadd.f32 %v931, 1.0
    %v933 = vrcp.pop %v932
    %v934 = vmul.f32 1.0, %v933
    %v935 = vtanh.pop %v928
    %v936 = vmul.f32 %v934, %v846
    %938 = vrot.lane.b32.xlu0 %v935, 64
    %v939 = vpop.permute.xlu0 %938
    %v941 = vmul.f32 %v934, %v939
    %943 = vrot.lane.b32.xlu0 %v941, 32
    %v944 = vpop.permute.xlu0 %943
    %v946 = vadd.f32 %v936, %v944
    %v947 = vtanh.pop %v946
    %949 = vrot.lane.b32.xlu0 %v947, 64
    %v950 = vpop.permute.xlu0 %949
    %v952 = vmul.f32 %v934, %v950
    %v953 = vlaneseq
    %v954 = vshrl.u32 %v953, 7
    %v955 = vsub.s32 0, %v954
    %v956 = vrot.slane %v31, %v955
    %958 = vrot.lane.b32.xlu0 %v956, 96
    %v959 = vpop.permute.xlu0 %958
    %v961 = vmul.f32 %v952, %v959
    %963 = vrot.lane.b32.xlu0 %v961, 32
    %v964 = vpop.permute.xlu0 %963
    %vm966 = vcmask 254976
    %v967 = vsel %vm966, %v964, 0.0
    %968 = vadd.xlane.f32.xlu0 %v967
    %v969 = vpop.xlane.xlu0 %968
    %v970 = vlaneseq
    %v971 = vshrl.u32 %v970, 7
    %v972 = vsub.s32 0, %v971
    %v973 = vrot.slane %v32, %v972
    %v974 = vadd.f32 %v969, %v973
    %vm975 = vcmask 1024
    %976 = vst.msk [vmem:[%s2] sm:$0x3] %vm975, %v974
    // Predicated region
    $region14: #{tpu_custom_call.1} parent=1 // pred_check
      _
    $region15: #{tpu_custom_call.1} parent=1 // pred_check_branch
      %978 = sbr.rel (0) target = $region17
    $region16: #{tpu_custom_call.1} parent=1 // pred_region
      _
    $region17: #{tpu_custom_call.1} parent=1 // pred_fallthru
      _
    // Predicated region
    $region18: #{tpu_custom_call.1} parent=1 // pred_check
      _
    $region19: #{tpu_custom_call.1} parent=1 // pred_check_branch
      %980 = sbr.rel (0) target = $region21
    $region20: #{tpu_custom_call.1} parent=1 // pred_region
      _
    $region21: #{tpu_custom_call.1} parent=1 // pred_fallthru
      _
    %981 = vsyncpa [#allocation3], 1

</llo_original>
